<compile_context>
chip_gen: v5e
topology: v5e:2x2
jax: 0.10.0
libtpu: 0.0.40
codegen_flags: <defaults>
</compile_context>

<pallas_src>
import functools

import jax
import jax.numpy as jnp
from jax.experimental import pallas as pl
from jax.experimental.pallas import tpu as pltpu

LANES = 128     # TPU lane width
SUBLANES = 8    # TPU sublane count (f32)


def _round_up(n, m):
    return (n + m - 1) // m * m


def mlp_kernel(x_ref, w1_ref, b1_ref, w2row_ref, b2_ref, o_ref):
    # ---- layer 1: hidden = relu(x @ W1 + b1) -------------------------------------
    # MXU matmul with f32 accumulation; bias/ReLU epilogue in f32 on the VPU.
    h = jnp.dot(x_ref[...], w1_ref[...], preferred_element_type=jnp.float32)
    h = jnp.maximum(h + b1_ref[...], 0.0)                                    # (TB, H)

    # ---- layer 2: out = h @ W2 + b2, with W2 presented as a (1, H) row ------------
    # VPU multiply + XLU lane reduction instead of a 1-column MXU pass.
    out_col = jnp.sum(h * w2row_ref[...], axis=-1, keepdims=True) + b2_ref[0, 0]  # (TB, 1)

    # Direct (TB, 1) store: the block maps to a contiguous HBM region of the (Bp, 1)
    # output, so the writeback DMA is tiny; no post-kernel slicing needed.
    o_ref[...] = out_col.astype(o_ref.dtype)


@functools.partial(jax.jit, static_argnames=("batch_tile",))
def two_layer_dense_net(x, w1, b1, w2, b2, *, batch_tile=512):
    """Forward pass of TwoLayerDenseNet.

    x : (B, D_in) activations
    w1: (D_in, H), b1: (1, H)   -- hidden Linear, stored (in, out) so kernel does x @ W
    w2: (H, 1),   b2: (1, 1)    -- predict Linear
    returns (B, 1)
    """
    B, D_in = x.shape
    H = w1.shape[1]

    # Batch tile: big tiles amortize the ~0.35us/step overhead for large B; for small B
    # take the whole (8-row aligned) batch in one step.  Pad B up to a tile multiple.
    TB = min(batch_tile, _round_up(B, SUBLANES))
    Bp = _round_up(B, TB)
    if Bp != B:
        x = jnp.pad(x, ((0, Bp - B), (0, 0)))

    # Present W2 as a (1, H) lane-dense row for the VPU/XLU second layer.
    w2_row = w2.reshape(1, H)

    # VMEM budget: double-buffered x tiles + double-buffered output blocks (a (TB, 1)
    # VMEM buffer still pads to 128 lanes) + resident weights + hidden activations,
    # with 2x headroom; clamped so it also fits v7x's 64 MiB-per-TC VMEM.
    est = 4 * (
        2 * TB * _round_up(D_in, LANES)                  # x tiles (double-buffered)
        + 2 * TB * LANES                                 # output blocks (lane-padded)
        + _round_up(D_in, SUBLANES) * _round_up(H, LANES)  # resident W1
        + 2 * SUBLANES * _round_up(H, LANES)             # b1 + W2 row
        + TB * _round_up(H, LANES)                       # hidden activations
    )
    vmem_limit = min(max(2 * est, 16 * 1024 * 1024), 48 * 1024 * 1024)

    out = pl.pallas_call(
        mlp_kernel,
        out_shape=jax.ShapeDtypeStruct((Bp, 1), x.dtype),
        grid=(Bp // TB,),
        in_specs=[
            pl.BlockSpec((TB, D_in), lambda i: (i, 0)),          # x: batch-tiled
            pl.BlockSpec((D_in, H), lambda i: (0, 0)),           # W1: resident
            pl.BlockSpec((1, H), lambda i: (0, 0)),              # b1: resident row
            pl.BlockSpec((1, H), lambda i: (0, 0)),              # W2 row: resident
            pl.BlockSpec(memory_space=pltpu.MemorySpace.SMEM),   # b2: scalar in SMEM
        ],
        out_specs=pl.BlockSpec((TB, 1), lambda i: (i, 0)),       # direct (TB,1) column
        compiler_params=pltpu.CompilerParams(
            dimension_semantics=("parallel",),   # batch steps shard across TCs on v7x
            vmem_limit_bytes=vmem_limit,
        ),
    )(x, w1, b1, w2_row, b2)

    # Drop padded batch rows.
    return out[:B]


def init_params(key, input_shape, hidden_layer_width):
    """Deterministic init mimicking torch.nn.Linear (uniform(-1/sqrt(fan_in), +))."""
    k1, k2, k3, k4 = jax.random.split(key, 4)
    bound1 = 1.0 / (input_shape ** 0.5)
    bound2 = 1.0 / (hidden_layer_width ** 0.5)
    w1 = jax.random.uniform(k1, (input_shape, hidden_layer_width),
                            jnp.float32, -bound1, bound1)
    b1 = jax.random.uniform(k2, (1, hidden_layer_width), jnp.float32, -bound1, bound1)
    w2 = jax.random.uniform(k3, (hidden_layer_width, 1), jnp.float32, -bound2, bound2)
    b2 = jax.random.uniform(k4, (1, 1), jnp.float32, -bound2, bound2)
    return w1, b1, w2, b2


if __name__ == "__main__":
    # Small shapes consistent with the module's forward: x is (batch, input_shape).
    # At this size the call is pure launch/DMA latency; the tiled/grid structure pays
    # off once B grows (batch many forwards into one call).
    batch = 8
    input_shape = 32
    hidden_layer_width = 64
    # n_classes is stored on the torch module but unused in forward(); omitted here.

    key = jax.random.PRNGKey(0)
    kx, kp = jax.random.split(key)
    x = jax.random.normal(kx, (batch, input_shape), jnp.float32)
    w1, b1, w2, b2 = init_params(kp, input_shape, hidden_layer_width)

    out = two_layer_dense_net(x, w1, b1, w2, b2)
    out = jax.block_until_ready(out)

    # Pure-JAX reference check.
    ref = jnp.maximum(x @ w1 + b1, 0.0) @ w2 + b2
    assert out.shape == (batch, 1), out.shape
    assert jnp.allclose(out, ref, atol=1e-5, rtol=1e-5), "mismatch vs reference"

    print("KERNEL_OK")
</pallas_src>

<mosaic_0001>
module attributes {stable_mosaic.version = 11 : i64} {
  func.func @mlp_kernel(%arg0: i32, %arg1: memref<8x32xf32, #tpu.memory_space<vmem>>, %arg2: memref<32x64xf32, #tpu.memory_space<vmem>>, %arg3: memref<1x64xf32, #tpu.memory_space<vmem>>, %arg4: memref<1x64xf32, #tpu.memory_space<vmem>>, %arg5: memref<1x1xf32, #tpu.memory_space<smem>>, %arg6: memref<8x1xf32, #tpu.memory_space<vmem>>) attributes {dimension_semantics = [#tpu.dimension_semantics<parallel>], iteration_bounds = array<i64: 1>, scalar_prefetch = 0 : i64, scratch_operands = 0 : i64, tpu.core_type = #tpu.core_type<tc>, window_params = [{transform_indices = @transform_0, window_bounds = array<i64: 8, 32>}, {pipeline_mode = #tpu.pipeline_mode<synchronous>, transform_indices = @transform_1, window_bounds = array<i64: 32, 64>}, {pipeline_mode = #tpu.pipeline_mode<synchronous>, transform_indices = @transform_2, window_bounds = array<i64: 1, 64>}, {pipeline_mode = #tpu.pipeline_mode<synchronous>, transform_indices = @transform_3, window_bounds = array<i64: 1, 64>}, {transform_indices = @transform_4, window_bounds = array<i64: 1, 1>}, {transform_indices = @transform_5, window_bounds = array<i64: 8, 1>}]} {
    %c0 = arith.constant 0 : index
    %c0_0 = arith.constant 0 : index
    %0 = vector.load %arg1[%c0, %c0_0] : memref<8x32xf32, #tpu.memory_space<vmem>>, vector<8x32xf32>
    %c0_1 = arith.constant 0 : index
    %c0_2 = arith.constant 0 : index
    %1 = vector.load %arg2[%c0_1, %c0_2] : memref<32x64xf32, #tpu.memory_space<vmem>>, vector<32x64xf32>
    %cst = arith.constant dense<0.000000e+00> : vector<8x64xf32>
    %2 = tpu.matmul %0, %1, %cst {dimension_numbers = #tpu.dot_dimension_numbers<[1], [0], [0], [1], [0, 0, 1, 1], [], []>} : vector<8x32xf32>, vector<32x64xf32>, vector<8x64xf32> -> vector<8x64xf32>
    %c0_3 = arith.constant 0 : index
    %c0_4 = arith.constant 0 : index
    %3 = vector.load %arg3[%c0_3, %c0_4] : memref<1x64xf32, #tpu.memory_space<vmem>>, vector<1x64xf32>
    %4 = vector.broadcast %3 : vector<1x64xf32> to vector<8x64xf32>
    %5 = arith.addf %2, %4 : vector<8x64xf32>
    %cst_5 = arith.constant 0.000000e+00 : f32
    %6 = vector.broadcast %cst_5 : f32 to vector<8x64xf32>
    %7 = arith.maximumf %5, %6 : vector<8x64xf32>
    %c0_6 = arith.constant 0 : index
    %c0_7 = arith.constant 0 : index
    %8 = vector.load %arg4[%c0_6, %c0_7] : memref<1x64xf32, #tpu.memory_space<vmem>>, vector<1x64xf32>
    %9 = vector.broadcast %8 : vector<1x64xf32> to vector<8x64xf32>
    %10 = arith.mulf %7, %9 : vector<8x64xf32>
    %cst_8 = arith.constant dense<0.000000e+00> : vector<8xf32>
    %11 = vector.multi_reduction <add>, %10, %cst_8 [1] : vector<8x64xf32> to vector<8xf32>
    %12 = vector.shape_cast %11 : vector<8xf32> to vector<8x1xf32>
    %c0_9 = arith.constant 0 : index
    %c0_10 = arith.constant 0 : index
    %13 = memref.load %arg5[%c0_9, %c0_10] : memref<1x1xf32, #tpu.memory_space<smem>>
    %14 = vector.broadcast %13 : f32 to vector<8x1xf32>
    %15 = arith.addf %12, %14 : vector<8x1xf32>
    %c0_11 = arith.constant 0 : index
    %c0_12 = arith.constant 0 : index
    %16 = vector.load %arg6[%c0_11, %c0_12] : memref<8x1xf32, #tpu.memory_space<vmem>>, vector<8x1xf32>
    tpu.vector_store %arg6[%c0_11, %c0_12], %15 {strides = array<i32>} : memref<8x1xf32, #tpu.memory_space<vmem>>, vector<8x1xf32>,
    return
  }
  func.func @transform_0(%arg0: i32) -> (i32, i32) {
    %c0_i32 = arith.constant 0 : i32
    %c0_i32_0 = arith.constant 0 : i32
    return %arg0, %c0_i32 : i32, i32
  }
  func.func @transform_1(%arg0: i32) -> (i32, i32) {
    %c0_i32 = arith.constant 0 : i32
    %c0_i32_0 = arith.constant 0 : i32
    %c0_i32_1 = arith.constant 0 : i32
    return %c0_i32, %c0_i32_0 : i32, i32
  }
  func.func @transform_2(%arg0: i32) -> (i32, i32) {
    %c0_i32 = arith.constant 0 : i32
    %c0_i32_0 = arith.constant 0 : i32
    %c0_i32_1 = arith.constant 0 : i32
    return %c0_i32, %c0_i32_0 : i32, i32
  }
  func.func @transform_3(%arg0: i32) -> (i32, i32) {
    %c0_i32 = arith.constant 0 : i32
    %c0_i32_0 = arith.constant 0 : i32
    %c0_i32_1 = arith.constant 0 : i32
    return %c0_i32, %c0_i32_0 : i32, i32
  }
  func.func @transform_4(%arg0: i32) -> (i32, i32) {
    %c0_i32 = arith.constant 0 : i32
    %c0_i32_0 = arith.constant 0 : i32
    %c0_i32_1 = arith.constant 0 : i32
    return %c0_i32, %c0_i32_0 : i32, i32
  }
  func.func @transform_5(%arg0: i32) -> (i32, i32) {
    %c0_i32 = arith.constant 0 : i32
    %c0_i32_0 = arith.constant 0 : i32
    return %arg0, %c0_i32 : i32, i32
  }
}

</mosaic_0001>

<llo_original>
// kernel: two_layer_dense_net.1
$region0: #{two_layer_dense_net.1}
  #allocation0 [shape = 'u32[]', space=smem, size = 0x4, offset = 0x4, fixed_abs, tag = 'smem constant byte address 0x4 - core index']
  #allocation1 [shape = 'u32[72,128]{1,0:T(1,128)}', space=vmem, size = 0x9000, scoped, tag = 'internal scratch']
  #allocation2 [shape = 'f32[1,1]{1,0:T(1,128)S(6)}', space=smem, size = 0x200, scoped, tag = 'scoped memory for two_layer_dense_net.1']
  %s0 = inlined_call_operand.hbm [shape: f32[8,32], index: 0, kind: input, shape index: {}]
  %s1 = inlined_call_operand.hbm [shape: f32[32,64], index: 1, kind: input, shape index: {}]
  %s2 = inlined_call_operand.vmem [shape: f32[1,64], index: 2, kind: input, shape index: {}]
  %s3 = inlined_call_operand.vmem [shape: f32[1,64], index: 3, kind: input, shape index: {}]
  %s4 = inlined_call_operand.<no memory space> [shape: f32[1,1], index: 4, kind: input, shape index: {}]
  %s5 = inlined_call_operand.vmem [shape: f32[8,1], index: 5, kind: output, shape index: {}]
  %s6 = sld [smem:[#allocation0]]
  $region38: #{two_layer_dense_net.1} parent=0
    _
  %s8 = ssub.s32 1, %s6
  %s9 = scalar_select 0, %s8, %s6
  %10 = sst [smem:[#allocation2]] %s4
  $region1: #{two_layer_dense_net.1} parent=0
    #allocation3 [shape = 'u8[4096]{0}', space=vmem, size = 0x1000, scoped, tag = 'input window, operand 0, single buffered']
    #allocation4 [shape = 's32[1]{0}', space=sflag, size = 0x4, scoped, tag = 'scoped memory for two_layer_dense_net.1']
    #allocation5 [shape = 'u8[16384]{0}', space=vmem, size = 0x4000, scoped, tag = 'input window, operand 1, single buffered']
    #allocation6 [shape = 's32[1]{0}', space=sflag, size = 0x4, scoped, tag = 'scoped memory for two_layer_dense_net.1']
    %11 = vsyncpa [#allocation4], 0
    %12 = vsyncpa [#allocation6], 0
    // Predicated region
    $region2: #{two_layer_dense_net.1} parent=1 // pred_check
      _
    $region3: #{two_layer_dense_net.1} parent=1 // pred_check_branch
      %14 = sbr.rel (0) target = $region5
    $region4: #{two_layer_dense_net.1} parent=1 // pred_region
      %16 = vsyncadd [#allocation4], 0
      %s18 = sshll.u32 %s0, 4
      %s19 = int_to_ptr.hbm [resolvable:$true] %s18
      %s20 = sshll.u32 [#allocation3], 4
      %s21 = int_to_ptr.vmem [resolvable:$true] %s20
      %23 = dma.hbm_to_vmem [thread:$0]  %s19, 128, %s21, [#allocation4]
    $region5: #{two_layer_dense_net.1} parent=1 // pred_fallthru
      _
    // Predicated region
    $region6: #{two_layer_dense_net.1} parent=1 // pred_check
      _
    $region7: #{two_layer_dense_net.1} parent=1 // pred_check_branch
      %25 = sbr.rel (0) target = $region9
    $region8: #{two_layer_dense_net.1} parent=1 // pred_region
      %27 = vsyncadd [#allocation6], 0
      %s28 = sshll.u32 %s1, 4
      %s29 = int_to_ptr.hbm [resolvable:$true] %s28
      %s30 = sshll.u32 [#allocation5], 4
      %s31 = int_to_ptr.vmem [resolvable:$true] %s30
      %36 = dma.hbm_to_vmem [thread:$0]  %s29, 512, %s31, [#allocation6], 128, 128, 8
    $region9: #{two_layer_dense_net.1} parent=1 // pred_fallthru
      _
    // Predicated region
    $region10: #{two_layer_dense_net.1} parent=1 // pred_check
      _
    $region11: #{two_layer_dense_net.1} parent=1 // pred_check_branch
      %38 = sbr.rel (0) target = $region13
    $region12: #{two_layer_dense_net.1} parent=1 // pred_region
      _
    $region13: #{two_layer_dense_net.1} parent=1 // pred_fallthru
      _
    // Predicated region
    $region14: #{two_layer_dense_net.1} parent=1 // pred_check
      _
    $region15: #{two_layer_dense_net.1} parent=1 // pred_check_branch
      %40 = sbr.rel (0) target = $region17
    $region16: #{two_layer_dense_net.1} parent=1 // pred_region
      _
    $region17: #{two_layer_dense_net.1} parent=1 // pred_fallthru
      _
    // Predicated region
    $region18: #{two_layer_dense_net.1} parent=1 // pred_check
      _
    $region19: #{two_layer_dense_net.1} parent=1 // pred_check_branch
      %42 = sbr.rel (0) target = $region21
    $region20: #{two_layer_dense_net.1} parent=1 // pred_region
      _
    $region21: #{two_layer_dense_net.1} parent=1 // pred_fallthru
      _
    // Predicated region
    $region22: #{two_layer_dense_net.1} parent=1 // pred_check
      _
    $region23: #{two_layer_dense_net.1} parent=1 // pred_check_branch
      %44 = sbr.rel (0) target = $region25
    $region24: #{two_layer_dense_net.1} parent=1 // pred_region
      %46 = dma.done [#allocation4], 128
    $region25: #{two_layer_dense_net.1} parent=1 // pred_fallthru
      _
    // Predicated region
    $region26: #{two_layer_dense_net.1} parent=1 // pred_check
      _
    $region27: #{two_layer_dense_net.1} parent=1 // pred_check_branch
      %48 = sbr.rel (0) target = $region29
    $region28: #{two_layer_dense_net.1} parent=1 // pred_region
      %50 = dma.done [#allocation6], 512
    $region29: #{two_layer_dense_net.1} parent=1 // pred_fallthru
      _
    %v51 = vld [vmem:[#allocation3] sm:$0xff]
    %v52 = vld [vmem:[#allocation5] sm:$0xff]
    %v53 = vld [vmem:[#allocation5 + $0x8] sm:$0xff]
    %v54 = vld [vmem:[#allocation5 + $0x10] sm:$0xff]
    %v55 = vld [vmem:[#allocation5 + $0x18] sm:$0xff]
    %v56 = vld [vmem:[%s2] sm:$0x1]
    %v58 = vperm.slane %v56, 0
    %vm60 = vcmask 261120
    %v62 = vsel %vm60, %v51, 0
    %64 = vmatpush.msra.mxu0 0.0
    %65 = vmatpush.msra.mxu0 0.0
    %66 = vmatpush.msra.mxu0 0.0
    %67 = vmatpush.msra.mxu0 0.0
    %68 = vmatpush.msra.mxu0 0.0
    %69 = vmatpush.msra.mxu0 0.0
    %70 = vmatpush.msra.mxu0 0.0
    %71 = vmatpush.msra.mxu0 0.0
    %72 = vmatpush.msra.mxu0 0.0
    %73 = vmatpush.msra.mxu0 0.0
    %74 = vmatpush.msra.mxu0 0.0
    %75 = vmatpush.msra.mxu0 0.0
    %76 = vmatpush.msra.mxu0 %v55
    %77 = vmatpush.msra.mxu0 %v54
    %78 = vmatpush.msra.mxu0 %v53
    %79 = vmatpush.msra.mxu0 %v52
    %80 = vmatmul.f32.gmra.mxu0 %v62
    %v81 = vpop.f32.mrf.mxu0
    %v82 = vadd.f32 %v58, %v81
    %83 = vdwg.mxu0
    %v84 = vmax.f32 %v82, 0.0
    %v85 = vld [vmem:[%s3] sm:$0x1]
    %v87 = vperm.slane %v85, 0
    %v89 = vmul.f32 %v84, %v87
    %vm90 = vcmask 523264
    %v91 = vsel %vm90, %v89, 0.0
    %92 = vadd.xlane.f32.xlu0 %v91
    %v93 = vpop.xlane.xlu0 %92
    %s94 = sld [smem:[#allocation2]]
    %v95 = vstv %s94
    %v96 = vadd.f32 %v93, %v95
    %vm97 = vcmask 7168
    %98 = vst.msk [vmem:[%s5] sm:$0xff] %vm97, %v96
    // Predicated region
    $region30: #{two_layer_dense_net.1} parent=1 // pred_check
      _
    $region31: #{two_layer_dense_net.1} parent=1 // pred_check_branch
      %100 = sbr.rel (0) target = $region33
    $region32: #{two_layer_dense_net.1} parent=1 // pred_region
      _
    $region33: #{two_layer_dense_net.1} parent=1 // pred_fallthru
      _
    // Predicated region
    $region34: #{two_layer_dense_net.1} parent=1 // pred_check
      _
    $region35: #{two_layer_dense_net.1} parent=1 // pred_check_branch
      %102 = sbr.rel (0) target = $region37
    $region36: #{two_layer_dense_net.1} parent=1 // pred_region
      _
    $region37: #{two_layer_dense_net.1} parent=1 // pred_fallthru
      _
    %103 = vsyncpa [#allocation4], 1
    %104 = vsyncpa [#allocation6], 1

</llo_original>
